<compile_context>
chip_gen: v7x
topology: tpu7x:2x2x1
jax: 0.10.0
libtpu: 0.0.40
codegen_flags: <defaults>
</compile_context>

<pallas_src>
import jax
import jax.numpy as jnp
from jax.experimental import pallas as pl
from jax.experimental.pallas import tpu as pltpu

B = 2            # batch
S = 8            # sequence length
H = 768          # BERT hidden size (module hard-codes 768)
V = 128          # synthetic vocab size (small enough for the table to live in VMEM)
NUM_CLASSES = 2  # fc output
B_PAD = 8        # sublane-padded batch rows processed by the kernel


def fused_cls_head_kernel(ids_ref, emb_ref, mask_ref, w_ref, b_ref, o_ref):
    """ids_ref:  SMEM (B_PAD,) i32           emb_ref: VMEM (V, H) f32  (whole table)
    mask_ref: VMEM (B_PAD, 1) f32          w_ref:   VMEM (NUM_CLASSES, H) f32
    b_ref:    VMEM (1, NUM_CLASSES) f32    o_ref:   VMEM (B_PAD, NUM_CLASSES) f32
    """
    # Gather the CLS-token embedding rows directly from the VMEM-resident table via
    # dynamic sublane slices — no per-row HBM DMAs, no semaphores, no scratch buffer.
    # Pad rows carry id 0 (a valid table row), so no stale memory is ever read.
    rows = [emb_ref[pl.ds(ids_ref[r], 1), :] for r in range(B_PAD)]
    gathered = jnp.concatenate(rows, axis=0)                               # (B_PAD, H)

    # nn.Dropout(0.3): identity in inference/eval mode.
    # TODO(synk): training-mode stochastic dropout not applied (eval semantics).

    # fc = Linear(768, 2): two VPU broadcast-multiplies + f32 lane reductions.
    # The (1, H) -> (B_PAD, H) weight broadcasts happen once per kernel invocation
    # (outside any loop), so they are not repeated work.
    l0 = jnp.sum(gathered * w_ref[pl.ds(0, 1), :], axis=-1, keepdims=True)  # (B_PAD, 1)
    l1 = jnp.sum(gathered * w_ref[pl.ds(1, 1), :], axis=-1, keepdims=True)  # (B_PAD, 1)

    # Fold the per-row attention-mask multiply AFTER the reduction (algebraically the
    # same as masking the (B_PAD, H) tile; saves ~6 vregs of VPU multiplies per logit).
    o_ref[...] = jnp.concatenate([l0, l1], axis=-1) * mask_ref[...] + b_ref[...]


def text_classifier_forward(params, input_ids, attention_mask):
    """params: embed (V,H) f32, w (2,H) f32, b (1,2) f32. Returns (B, 2) f32 logits."""
    b = input_ids.shape[0]
    assert b <= B_PAD, "this head kernel processes up to B_PAD rows in one step"

    # Only the CLS position is needed by the head — pad the batch to 8 sublane rows.
    # Pad ids with 0 (valid table row) and pad mask with 0, so pad-row logits reduce to
    # the bias and are sliced off below.
    cls_ids = jnp.zeros((B_PAD,), jnp.int32).at[:b].set(input_ids[:, 0].astype(jnp.int32))
    cls_mask = jnp.zeros((B_PAD, 1), jnp.float32).at[:b, 0].set(
        attention_mask[:, 0].astype(jnp.float32))

    out = pl.pallas_call(
        fused_cls_head_kernel,
        out_shape=jax.ShapeDtypeStruct((B_PAD, NUM_CLASSES), jnp.float32),
        grid_spec=pltpu.PrefetchScalarGridSpec(
            num_scalar_prefetch=1,            # CLS token ids -> SMEM
            grid=(1,),                        # whole head in one grid step
            in_specs=[
                # Whole embedding table VMEM-resident: one contiguous 384 KiB DMA.
                # TODO(synk): for a real BERT vocab (30522x768 f32 ~ 89 MiB) keep the
                # table in HBM (memory_space=pl.ANY) and gather only b rows via
                # make_async_copy; it cannot be made VMEM-resident on any generation.
                pl.BlockSpec((V, H), lambda i, ids: (0, 0)),
                pl.BlockSpec((B_PAD, 1), lambda i, ids: (0, 0)),        # CLS attention mask
                pl.BlockSpec((NUM_CLASSES, H), lambda i, ids: (0, 0)),  # fc weight (2, 768)
                pl.BlockSpec((1, NUM_CLASSES), lambda i, ids: (0, 0)),  # fc bias
            ],
            out_specs=pl.BlockSpec((B_PAD, NUM_CLASSES), lambda i, ids: (0, 0)),
        ),
        compiler_params=pltpu.CompilerParams(
            dimension_semantics=("arbitrary",)),
    )(cls_ids, params["embed"], cls_mask, params["w"], params["b"])
    return out[:b]


if __name__ == "__main__":
    key = jax.random.PRNGKey(0)
    k_emb, k_w, k_b, k_ids = jax.random.split(key, 4)

    # Deterministic synthetic parameters.
    embed_table = jax.random.normal(k_emb, (V, H), dtype=jnp.float32) * 0.02
    fc_w = jax.random.normal(k_w, (NUM_CLASSES, H), dtype=jnp.float32) * 0.02  # Linear(768,2).weight
    fc_b = jax.random.normal(k_b, (NUM_CLASSES,), dtype=jnp.float32) * 0.02    # Linear(768,2).bias

    params = {"embed": embed_table, "w": fc_w, "b": fc_b.reshape(1, NUM_CLASSES)}

    # Example inputs: token ids + attention mask (last 2 positions padded out).
    input_ids = jax.random.randint(k_ids, (B, S), 0, V, dtype=jnp.int32)
    attention_mask = jnp.ones((B, S), dtype=jnp.int32).at[:, S - 2:].set(0)

    logits = text_classifier_forward(params, input_ids, attention_mask)
    logits = jax.block_until_ready(logits)

    # Pure-JAX reference mirroring the PyTorch forward on the synthetic BERT.
    hidden = embed_table[input_ids] * attention_mask[..., None].astype(jnp.float32)
    pooled = hidden[:, 0, :]                  # CLS token; dropout is identity in eval
    ref = pooled @ fc_w.T + fc_b

    assert logits.shape == (B, NUM_CLASSES)
    assert jnp.allclose(logits, ref, atol=1e-4, rtol=1e-4)

    print("KERNEL_OK")
</pallas_src>

<mosaic_0001>
module attributes {stable_mosaic.version = 11 : i64} {
  func.func @fused_cls_head_kernel(%arg0: i32, %arg1: memref<8xi32, #tpu.memory_space<smem>>, %arg2: memref<128x768xf32, #tpu.memory_space<vmem>>, %arg3: memref<8x1xf32, #tpu.memory_space<vmem>>, %arg4: memref<2x768xf32, #tpu.memory_space<vmem>>, %arg5: memref<1x2xf32, #tpu.memory_space<vmem>>, %arg6: memref<8x2xf32, #tpu.memory_space<vmem>>) attributes {dimension_semantics = [#tpu.dimension_semantics<arbitrary>], iteration_bounds = array<i64: 1>, scalar_prefetch = 1 : i64, scratch_operands = 0 : i64, tpu.core_type = #tpu.core_type<tc>, window_params = [{pipeline_mode = #tpu.pipeline_mode<synchronous>, transform_indices = @transform_0, window_bounds = array<i64: 128, 768>}, {pipeline_mode = #tpu.pipeline_mode<synchronous>, transform_indices = @transform_1, window_bounds = array<i64: 8, 1>}, {pipeline_mode = #tpu.pipeline_mode<synchronous>, transform_indices = @transform_2, window_bounds = array<i64: 2, 768>}, {pipeline_mode = #tpu.pipeline_mode<synchronous>, transform_indices = @transform_3, window_bounds = array<i64: 1, 2>}, {pipeline_mode = #tpu.pipeline_mode<synchronous>, transform_indices = @transform_4, window_bounds = array<i64: 8, 2>}]} {
    %c0 = arith.constant 0 : index
    %0 = memref.load %arg1[%c0] : memref<8xi32, #tpu.memory_space<smem>>
    %1 = arith.index_cast %0 : i32 to index
    %c0_0 = arith.constant 0 : index
    %2 = vector.load %arg2[%1, %c0_0] : memref<128x768xf32, #tpu.memory_space<vmem>>, vector<1x768xf32>
    %c1 = arith.constant 1 : index
    %3 = memref.load %arg1[%c1] : memref<8xi32, #tpu.memory_space<smem>>
    %4 = arith.index_cast %3 : i32 to index
    %c0_1 = arith.constant 0 : index
    %5 = vector.load %arg2[%4, %c0_1] : memref<128x768xf32, #tpu.memory_space<vmem>>, vector<1x768xf32>
    %c2 = arith.constant 2 : index
    %6 = memref.load %arg1[%c2] : memref<8xi32, #tpu.memory_space<smem>>
    %7 = arith.index_cast %6 : i32 to index
    %c0_2 = arith.constant 0 : index
    %8 = vector.load %arg2[%7, %c0_2] : memref<128x768xf32, #tpu.memory_space<vmem>>, vector<1x768xf32>
    %c3 = arith.constant 3 : index
    %9 = memref.load %arg1[%c3] : memref<8xi32, #tpu.memory_space<smem>>
    %10 = arith.index_cast %9 : i32 to index
    %c0_3 = arith.constant 0 : index
    %11 = vector.load %arg2[%10, %c0_3] : memref<128x768xf32, #tpu.memory_space<vmem>>, vector<1x768xf32>
    %c4 = arith.constant 4 : index
    %12 = memref.load %arg1[%c4] : memref<8xi32, #tpu.memory_space<smem>>
    %13 = arith.index_cast %12 : i32 to index
    %c0_4 = arith.constant 0 : index
    %14 = vector.load %arg2[%13, %c0_4] : memref<128x768xf32, #tpu.memory_space<vmem>>, vector<1x768xf32>
    %c5 = arith.constant 5 : index
    %15 = memref.load %arg1[%c5] : memref<8xi32, #tpu.memory_space<smem>>
    %16 = arith.index_cast %15 : i32 to index
    %c0_5 = arith.constant 0 : index
    %17 = vector.load %arg2[%16, %c0_5] : memref<128x768xf32, #tpu.memory_space<vmem>>, vector<1x768xf32>
    %c6 = arith.constant 6 : index
    %18 = memref.load %arg1[%c6] : memref<8xi32, #tpu.memory_space<smem>>
    %19 = arith.index_cast %18 : i32 to index
    %c0_6 = arith.constant 0 : index
    %20 = vector.load %arg2[%19, %c0_6] : memref<128x768xf32, #tpu.memory_space<vmem>>, vector<1x768xf32>
    %c7 = arith.constant 7 : index
    %21 = memref.load %arg1[%c7] : memref<8xi32, #tpu.memory_space<smem>>
    %22 = arith.index_cast %21 : i32 to index
    %c0_7 = arith.constant 0 : index
    %23 = vector.load %arg2[%22, %c0_7] : memref<128x768xf32, #tpu.memory_space<vmem>>, vector<1x768xf32>
    %24 = tpu.concatenate %2, %5, %8, %11, %14, %17, %20, %23 in 0 : vector<1x768xf32>, vector<1x768xf32>, vector<1x768xf32>, vector<1x768xf32>, vector<1x768xf32>, vector<1x768xf32>, vector<1x768xf32>, vector<1x768xf32> -> vector<8x768xf32>
    %c0_8 = arith.constant 0 : index
    %c0_9 = arith.constant 0 : index
    %25 = vector.load %arg4[%c0_8, %c0_9] : memref<2x768xf32, #tpu.memory_space<vmem>>, vector<1x768xf32>
    %26 = vector.broadcast %25 : vector<1x768xf32> to vector<8x768xf32>
    %27 = arith.mulf %24, %26 : vector<8x768xf32>
    %cst = arith.constant dense<0.000000e+00> : vector<8xf32>
    %28 = vector.multi_reduction <add>, %27, %cst [1] : vector<8x768xf32> to vector<8xf32>
    %29 = vector.shape_cast %28 : vector<8xf32> to vector<8x1xf32>
    %c1_10 = arith.constant 1 : index
    %c0_11 = arith.constant 0 : index
    %30 = vector.load %arg4[%c1_10, %c0_11] : memref<2x768xf32, #tpu.memory_space<vmem>>, vector<1x768xf32>
    %31 = vector.broadcast %30 : vector<1x768xf32> to vector<8x768xf32>
    %32 = arith.mulf %24, %31 : vector<8x768xf32>
    %cst_12 = arith.constant dense<0.000000e+00> : vector<8xf32>
    %33 = vector.multi_reduction <add>, %32, %cst_12 [1] : vector<8x768xf32> to vector<8xf32>
    %34 = vector.shape_cast %33 : vector<8xf32> to vector<8x1xf32>
    %35 = tpu.concatenate %29, %34 in 1 : vector<8x1xf32>, vector<8x1xf32> -> vector<8x2xf32>
    %c0_13 = arith.constant 0 : index
    %c0_14 = arith.constant 0 : index
    %36 = vector.load %arg3[%c0_13, %c0_14] : memref<8x1xf32, #tpu.memory_space<vmem>>, vector<8x1xf32>
    %37 = vector.broadcast %36 : vector<8x1xf32> to vector<8x2xf32>
    %38 = arith.mulf %35, %37 : vector<8x2xf32>
    %c0_15 = arith.constant 0 : index
    %c0_16 = arith.constant 0 : index
    %39 = vector.load %arg5[%c0_15, %c0_16] : memref<1x2xf32, #tpu.memory_space<vmem>>, vector<1x2xf32>
    %40 = vector.broadcast %39 : vector<1x2xf32> to vector<8x2xf32>
    %41 = arith.addf %38, %40 : vector<8x2xf32>
    %c0_17 = arith.constant 0 : index
    %c0_18 = arith.constant 0 : index
    %42 = vector.load %arg6[%c0_17, %c0_18] : memref<8x2xf32, #tpu.memory_space<vmem>>, vector<8x2xf32>
    tpu.vector_store %arg6[%c0_17, %c0_18], %41 {strides = array<i32>} : memref<8x2xf32, #tpu.memory_space<vmem>>, vector<8x2xf32>,
    return
  }
  func.func @transform_0(%arg0: i32, %arg1: memref<8xi32, #tpu.memory_space<smem>>) -> (i32, i32) {
    %c0_i32 = arith.constant 0 : i32
    %c0_i32_0 = arith.constant 0 : i32
    %c0_i32_1 = arith.constant 0 : i32
    return %c0_i32, %c0_i32_0 : i32, i32
  }
  func.func @transform_1(%arg0: i32, %arg1: memref<8xi32, #tpu.memory_space<smem>>) -> (i32, i32) {
    %c0_i32 = arith.constant 0 : i32
    %c0_i32_0 = arith.constant 0 : i32
    %c0_i32_1 = arith.constant 0 : i32
    return %c0_i32, %c0_i32_0 : i32, i32
  }
  func.func @transform_2(%arg0: i32, %arg1: memref<8xi32, #tpu.memory_space<smem>>) -> (i32, i32) {
    %c0_i32 = arith.constant 0 : i32
    %c0_i32_0 = arith.constant 0 : i32
    %c0_i32_1 = arith.constant 0 : i32
    return %c0_i32, %c0_i32_0 : i32, i32
  }
  func.func @transform_3(%arg0: i32, %arg1: memref<8xi32, #tpu.memory_space<smem>>) -> (i32, i32) {
    %c0_i32 = arith.constant 0 : i32
    %c0_i32_0 = arith.constant 0 : i32
    %c0_i32_1 = arith.constant 0 : i32
    return %c0_i32, %c0_i32_0 : i32, i32
  }
  func.func @transform_4(%arg0: i32, %arg1: memref<8xi32, #tpu.memory_space<smem>>) -> (i32, i32) {
    %c0_i32 = arith.constant 0 : i32
    %c0_i32_0 = arith.constant 0 : i32
    %c0_i32_1 = arith.constant 0 : i32
    return %c0_i32, %c0_i32_0 : i32, i32
  }
}

</mosaic_0001>

<llo_original>
// kernel: tpu_custom_call.1
$region0: #{tpu_custom_call.1}
  #allocation0 [shape = 'u32[]', space=smem, size = 0x4, offset = 0x4, fixed_abs, tag = 'smem constant byte address 0x4 - core index']
  #allocation1 [shape = 'u32[144,128]{1,0:T(1,128)}', space=vmem, size = 0x12000, scoped, tag = 'internal scratch']
  #allocation2 [shape = 's32[1]{0}', space=sflag, size = 0x4, scoped, tag = 'scoped memory for tpu_custom_call.1']
  #allocation3 [shape = 'u8[512]{0}', space=smem, size = 0x200, scoped, tag = 'prefetched SMEM operand 0']
  %s0 = inlined_call_operand.vmem [shape: s32[8], index: 0, kind: input, shape index: {}]
  %s1 = inlined_call_operand.hbm [shape: f32[128,768], index: 1, kind: input, shape index: {}]
  %s2 = inlined_call_operand.vmem [shape: f32[8,1], index: 2, kind: input, shape index: {}]
  %s3 = inlined_call_operand.vmem [shape: f32[2,768], index: 3, kind: input, shape index: {}]
  %s4 = inlined_call_operand.vmem [shape: f32[1,2], index: 4, kind: input, shape index: {}]
  %s5 = inlined_call_operand.vmem [shape: f32[8,2], index: 5, kind: output, shape index: {}]
  %s6 = sld [smem:[#allocation0]]
  $region30: #{tpu_custom_call.1} parent=0
    _
  %s8 = ssub.s32 1, %s6
  %s9 = scalar_select 0, %s8, %s6
  %s10 = sshll.u32 %s0, 4
  %s11 = int_to_ptr.vmem [resolvable:$true] %s10
  %13 = dma.vmem_to_smem %s11, 16, [#allocation3], [#allocation2]
  %14 = dma.done [#allocation2], 16
  %15 = sfence
  $region1: #{tpu_custom_call.1} parent=0
    #allocation4 [shape = 'u8[393216]{0}', space=vmem, size = 0x60000, scoped, tag = 'input window, operand 1, single buffered']
    #allocation5 [shape = 's32[1]{0}', space=sflag, size = 0x4, scoped, tag = 'scoped memory for tpu_custom_call.1']
    %16 = vsyncpa [#allocation5], 0
    // Predicated region
    $region2: #{tpu_custom_call.1} parent=1 // pred_check
      _
    $region3: #{tpu_custom_call.1} parent=1 // pred_check_branch
      %18 = sbr.rel (0) target = $region5
    $region4: #{tpu_custom_call.1} parent=1 // pred_region
      %s20 = ssub.s32 12288, 12288
      %21 = vsyncadd [#allocation5], %s20
      %s22 = sshll.u32 [#allocation4], 4
      %s23 = int_to_ptr.vmem [resolvable:$true] %s22
      %28 = dma.hbm_to_vmem [thread:$0]  %s1, 12288, %s23, [#allocation5], 768, 768, 48
    $region5: #{tpu_custom_call.1} parent=1 // pred_fallthru
      _
    // Predicated region
    $region6: #{tpu_custom_call.1} parent=1 // pred_check
      _
    $region7: #{tpu_custom_call.1} parent=1 // pred_check_branch
      %30 = sbr.rel (0) target = $region9
    $region8: #{tpu_custom_call.1} parent=1 // pred_region
      _
    $region9: #{tpu_custom_call.1} parent=1 // pred_fallthru
      _
    // Predicated region
    $region10: #{tpu_custom_call.1} parent=1 // pred_check
      _
    $region11: #{tpu_custom_call.1} parent=1 // pred_check_branch
      %32 = sbr.rel (0) target = $region13
    $region12: #{tpu_custom_call.1} parent=1 // pred_region
      _
    $region13: #{tpu_custom_call.1} parent=1 // pred_fallthru
      _
    // Predicated region
    $region14: #{tpu_custom_call.1} parent=1 // pred_check
      _
    $region15: #{tpu_custom_call.1} parent=1 // pred_check_branch
      %34 = sbr.rel (0) target = $region17
    $region16: #{tpu_custom_call.1} parent=1 // pred_region
      _
    $region17: #{tpu_custom_call.1} parent=1 // pred_fallthru
      _
    // Predicated region
    $region18: #{tpu_custom_call.1} parent=1 // pred_check
      _
    $region19: #{tpu_custom_call.1} parent=1 // pred_check_branch
      %36 = sbr.rel (0) target = $region21
    $region20: #{tpu_custom_call.1} parent=1 // pred_region
      %37 = dma.done [#allocation5], 12288
    $region21: #{tpu_custom_call.1} parent=1 // pred_fallthru
      _
    %s38 = sld [smem:[#allocation3]]
    %s39 = sshra.s32 %s38, 3
    %s40 = sand.u32 %s38, 7
    %s41 = sshra.s32 %s38, 3
    %s42 = sand.u32 %s38, 7
    %s43 = smul.u32 %s39, 6
    %s44 = smul.u32 %s43, 8
    %s45 = sadd.s32 %s44, %s42
    %s46 = scalar_lea.vmem [#allocation4], %s45
    %v47 = vld [vmem:[%s46] ss:$8 sm:$0xf]
    %v48 = vld [vmem:[%s46] ss:$8 sm:$0x30]
    %v49 = vor.u32 %v47, %v48
    %s50 = sld [smem:[#allocation3 + $0x1]]
    %s51 = sshra.s32 %s50, 3
    %s52 = sand.u32 %s50, 7
    %s53 = sshra.s32 %s50, 3
    %s54 = sand.u32 %s50, 7
    %s55 = smul.u32 %s51, 6
    %s56 = smul.u32 %s55, 8
    %s57 = sadd.s32 %s56, %s54
    %s58 = scalar_lea.vmem [#allocation4], %s57
    %v59 = vld [vmem:[%s58] ss:$8 sm:$0xf]
    %v60 = vld [vmem:[%s58] ss:$8 sm:$0x30]
    %v61 = vor.u32 %v59, %v60
    %s62 = sld [smem:[#allocation3 + $0x2]]
    %s63 = sshra.s32 %s62, 3
    %s64 = sand.u32 %s62, 7
    %s65 = sshra.s32 %s62, 3
    %s66 = sand.u32 %s62, 7
    %s67 = smul.u32 %s63, 6
    %s68 = smul.u32 %s67, 8
    %s69 = sadd.s32 %s68, %s66
    %s70 = scalar_lea.vmem [#allocation4], %s69
    %v71 = vld [vmem:[%s70] ss:$8 sm:$0xf]
    %v72 = vld [vmem:[%s70] ss:$8 sm:$0x30]
    %v73 = vor.u32 %v71, %v72
    %s74 = sld [smem:[#allocation3 + $0x3]]
    %s75 = sshra.s32 %s74, 3
    %s76 = sand.u32 %s74, 7
    %s77 = sshra.s32 %s74, 3
    %s78 = sand.u32 %s74, 7
    %s79 = smul.u32 %s75, 6
    %s80 = smul.u32 %s79, 8
    %s81 = sadd.s32 %s80, %s78
    %s82 = scalar_lea.vmem [#allocation4], %s81
    %v83 = vld [vmem:[%s82] ss:$8 sm:$0xf]
    %v84 = vld [vmem:[%s82] ss:$8 sm:$0x30]
    %v85 = vor.u32 %v83, %v84
    %s86 = sld [smem:[#allocation3 + $0x4]]
    %s87 = sshra.s32 %s86, 3
    %s88 = sand.u32 %s86, 7
    %s89 = sshra.s32 %s86, 3
    %s90 = sand.u32 %s86, 7
    %s91 = smul.u32 %s87, 6
    %s92 = smul.u32 %s91, 8
    %s93 = sadd.s32 %s92, %s90
    %s94 = scalar_lea.vmem [#allocation4], %s93
    %v95 = vld [vmem:[%s94] ss:$8 sm:$0xf]
    %v96 = vld [vmem:[%s94] ss:$8 sm:$0x30]
    %v97 = vor.u32 %v95, %v96
    %s98 = sld [smem:[#allocation3 + $0x5]]
    %s99 = sshra.s32 %s98, 3
    %s100 = sand.u32 %s98, 7
    %s101 = sshra.s32 %s98, 3
    %s102 = sand.u32 %s98, 7
    %s103 = smul.u32 %s99, 6
    %s104 = smul.u32 %s103, 8
    %s105 = sadd.s32 %s104, %s102
    %s106 = scalar_lea.vmem [#allocation4], %s105
    %v107 = vld [vmem:[%s106] ss:$8 sm:$0xf]
    %v108 = vld [vmem:[%s106] ss:$8 sm:$0x30]
    %v109 = vor.u32 %v107, %v108
    %s110 = sld [smem:[#allocation3 + $0x6]]
    %s111 = sshra.s32 %s110, 3
    %s112 = sand.u32 %s110, 7
    %s113 = sshra.s32 %s110, 3
    %s114 = sand.u32 %s110, 7
    %s115 = smul.u32 %s111, 6
    %s116 = smul.u32 %s115, 8
    %s117 = sadd.s32 %s116, %s114
    %s118 = scalar_lea.vmem [#allocation4], %s117
    %v119 = vld [vmem:[%s118] ss:$8 sm:$0xf]
    %v120 = vld [vmem:[%s118] ss:$8 sm:$0x30]
    %v121 = vor.u32 %v119, %v120
    %s122 = sld [smem:[#allocation3 + $0x7]]
    %s123 = sshra.s32 %s122, 3
    %s124 = sand.u32 %s122, 7
    %s125 = sshra.s32 %s122, 3
    %s126 = sand.u32 %s122, 7
    %s127 = smul.u32 %s123, 6
    %s128 = smul.u32 %s127, 8
    %s129 = sadd.s32 %s128, %s126
    %s130 = scalar_lea.vmem [#allocation4], %s129
    %v131 = vld [vmem:[%s130] ss:$8 sm:$0xf]
    %v132 = vld [vmem:[%s130] ss:$8 sm:$0x30]
    %v133 = vor.u32 %v131, %v132
    %v135 = vlaneseq
    %v136 = vshrl.u32 %v135, 7
    %v137 = vsub.s32 0, %v136
    %v138 = vrot.slane %v49, %v137
    %v139 = vlaneseq
    %v140 = vshrl.u32 %v139, 7
    %v141 = vsub.s32 1, %v140
    %v142 = vrot.slane %v49, %v141
    %v143 = vlaneseq
    %v144 = vshrl.u32 %v143, 7
    %v145 = vsub.s32 2, %v144
    %v146 = vrot.slane %v49, %v145
    %v147 = vlaneseq
    %v148 = vshrl.u32 %v147, 7
    %v149 = vsub.s32 3, %v148
    %v150 = vrot.slane %v49, %v149
    %v151 = vlaneseq
    %v152 = vshrl.u32 %v151, 7
    %v153 = vsub.s32 4, %v152
    %v154 = vrot.slane %v49, %v153
    %v155 = vlaneseq
    %v156 = vshrl.u32 %v155, 7
    %v157 = vsub.s32 5, %v156
    %v158 = vrot.slane %v49, %v157
    %v166 = vlaneseq
    %v167 = vshrl.u32 %v166, 7
    %v168 = vsub.s32 0, %v167
    %v169 = vrot.slane %v61, %v168
    %v170 = vlaneseq
    %v171 = vshrl.u32 %v170, 7
    %v172 = vsub.s32 1, %v171
    %v173 = vrot.slane %v61, %v172
    %v174 = vlaneseq
    %v175 = vshrl.u32 %v174, 7
    %v176 = vsub.s32 2, %v175
    %v177 = vrot.slane %v61, %v176
    %v178 = vlaneseq
    %v179 = vshrl.u32 %v178, 7
    %v180 = vsub.s32 3, %v179
    %v181 = vrot.slane %v61, %v180
    %v182 = vlaneseq
    %v183 = vshrl.u32 %v182, 7
    %v184 = vsub.s32 4, %v183
    %v185 = vrot.slane %v61, %v184
    %v186 = vlaneseq
    %v187 = vshrl.u32 %v186, 7
    %v188 = vsub.s32 5, %v187
    %v189 = vrot.slane %v61, %v188
    %v197 = vlaneseq
    %v198 = vshrl.u32 %v197, 7
    %v199 = vsub.s32 0, %v198
    %v200 = vrot.slane %v73, %v199
    %v201 = vlaneseq
    %v202 = vshrl.u32 %v201, 7
    %v203 = vsub.s32 1, %v202
    %v204 = vrot.slane %v73, %v203
    %v205 = vlaneseq
    %v206 = vshrl.u32 %v205, 7
    %v207 = vsub.s32 2, %v206
    %v208 = vrot.slane %v73, %v207
    %v209 = vlaneseq
    %v210 = vshrl.u32 %v209, 7
    %v211 = vsub.s32 3, %v210
    %v212 = vrot.slane %v73, %v211
    %v213 = vlaneseq
    %v214 = vshrl.u32 %v213, 7
    %v215 = vsub.s32 4, %v214
    %v216 = vrot.slane %v73, %v215
    %v217 = vlaneseq
    %v218 = vshrl.u32 %v217, 7
    %v219 = vsub.s32 5, %v218
    %v220 = vrot.slane %v73, %v219
    %v228 = vlaneseq
    %v229 = vshrl.u32 %v228, 7
    %v230 = vsub.s32 0, %v229
    %v231 = vrot.slane %v85, %v230
    %v232 = vlaneseq
    %v233 = vshrl.u32 %v232, 7
    %v234 = vsub.s32 1, %v233
    %v235 = vrot.slane %v85, %v234
    %v236 = vlaneseq
    %v237 = vshrl.u32 %v236, 7
    %v238 = vsub.s32 2, %v237
    %v239 = vrot.slane %v85, %v238
    %v240 = vlaneseq
    %v241 = vshrl.u32 %v240, 7
    %v242 = vsub.s32 3, %v241
    %v243 = vrot.slane %v85, %v242
    %v244 = vlaneseq
    %v245 = vshrl.u32 %v244, 7
    %v246 = vsub.s32 4, %v245
    %v247 = vrot.slane %v85, %v246
    %v248 = vlaneseq
    %v249 = vshrl.u32 %v248, 7
    %v250 = vsub.s32 5, %v249
    %v251 = vrot.slane %v85, %v250
    %v259 = vlaneseq
    %v260 = vshrl.u32 %v259, 7
    %v261 = vsub.s32 0, %v260
    %v262 = vrot.slane %v97, %v261
    %v263 = vlaneseq
    %v264 = vshrl.u32 %v263, 7
    %v265 = vsub.s32 1, %v264
    %v266 = vrot.slane %v97, %v265
    %v267 = vlaneseq
    %v268 = vshrl.u32 %v267, 7
    %v269 = vsub.s32 2, %v268
    %v270 = vrot.slane %v97, %v269
    %v271 = vlaneseq
    %v272 = vshrl.u32 %v271, 7
    %v273 = vsub.s32 3, %v272
    %v274 = vrot.slane %v97, %v273
    %v275 = vlaneseq
    %v276 = vshrl.u32 %v275, 7
    %v277 = vsub.s32 4, %v276
    %v278 = vrot.slane %v97, %v277
    %v279 = vlaneseq
    %v280 = vshrl.u32 %v279, 7
    %v281 = vsub.s32 5, %v280
    %v282 = vrot.slane %v97, %v281
    %v290 = vlaneseq
    %v291 = vshrl.u32 %v290, 7
    %v292 = vsub.s32 0, %v291
    %v293 = vrot.slane %v109, %v292
    %v294 = vlaneseq
    %v295 = vshrl.u32 %v294, 7
    %v296 = vsub.s32 1, %v295
    %v297 = vrot.slane %v109, %v296
    %v298 = vlaneseq
    %v299 = vshrl.u32 %v298, 7
    %v300 = vsub.s32 2, %v299
    %v301 = vrot.slane %v109, %v300
    %v302 = vlaneseq
    %v303 = vshrl.u32 %v302, 7
    %v304 = vsub.s32 3, %v303
    %v305 = vrot.slane %v109, %v304
    %v306 = vlaneseq
    %v307 = vshrl.u32 %v306, 7
    %v308 = vsub.s32 4, %v307
    %v309 = vrot.slane %v109, %v308
    %v310 = vlaneseq
    %v311 = vshrl.u32 %v310, 7
    %v312 = vsub.s32 5, %v311
    %v313 = vrot.slane %v109, %v312
    %v321 = vlaneseq
    %v322 = vshrl.u32 %v321, 7
    %v323 = vsub.s32 0, %v322
    %v324 = vrot.slane %v121, %v323
    %v325 = vlaneseq
    %v326 = vshrl.u32 %v325, 7
    %v327 = vsub.s32 1, %v326
    %v328 = vrot.slane %v121, %v327
    %v329 = vlaneseq
    %v330 = vshrl.u32 %v329, 7
    %v331 = vsub.s32 2, %v330
    %v332 = vrot.slane %v121, %v331
    %v333 = vlaneseq
    %v334 = vshrl.u32 %v333, 7
    %v335 = vsub.s32 3, %v334
    %v336 = vrot.slane %v121, %v335
    %v337 = vlaneseq
    %v338 = vshrl.u32 %v337, 7
    %v339 = vsub.s32 4, %v338
    %v340 = vrot.slane %v121, %v339
    %v341 = vlaneseq
    %v342 = vshrl.u32 %v341, 7
    %v343 = vsub.s32 5, %v342
    %v344 = vrot.slane %v121, %v343
    %v352 = vlaneseq
    %v353 = vshrl.u32 %v352, 7
    %v354 = vsub.s32 0, %v353
    %v355 = vrot.slane %v133, %v354
    %v356 = vlaneseq
    %v357 = vshrl.u32 %v356, 7
    %v358 = vsub.s32 1, %v357
    %v359 = vrot.slane %v133, %v358
    %v360 = vlaneseq
    %v361 = vshrl.u32 %v360, 7
    %v362 = vsub.s32 2, %v361
    %v363 = vrot.slane %v133, %v362
    %v364 = vlaneseq
    %v365 = vshrl.u32 %v364, 7
    %v366 = vsub.s32 3, %v365
    %v367 = vrot.slane %v133, %v366
    %v368 = vlaneseq
    %v369 = vshrl.u32 %v368, 7
    %v370 = vsub.s32 4, %v369
    %v371 = vrot.slane %v133, %v370
    %v372 = vlaneseq
    %v373 = vshrl.u32 %v372, 7
    %v374 = vsub.s32 5, %v373
    %v375 = vrot.slane %v133, %v374
    %vm382 = vcmask 1040384
    %v383 = vsel %vm382, %v138, %v169
    %v384 = vsel %vm382, %v142, %v173
    %v385 = vsel %vm382, %v146, %v177
    %v386 = vsel %vm382, %v150, %v181
    %v387 = vsel %vm382, %v154, %v185
    %v388 = vsel %vm382, %v158, %v189
    %vm389 = vcmask 1041408
    %v390 = vsel %vm389, %v383, %v200
    %v391 = vsel %vm389, %v384, %v204
    %v392 = vsel %vm389, %v385, %v208
    %v393 = vsel %vm389, %v386, %v212
    %v394 = vsel %vm389, %v387, %v216
    %v395 = vsel %vm389, %v388, %v220
    %vm396 = vcmask 1042432
    %v397 = vsel %vm396, %v390, %v231
    %v398 = vsel %vm396, %v391, %v235
    %v399 = vsel %vm396, %v392, %v239
    %v400 = vsel %vm396, %v393, %v243
    %v401 = vsel %vm396, %v394, %v247
    %v402 = vsel %vm396, %v395, %v251
    %vm403 = vcmask 1043456
    %v404 = vsel %vm403, %v397, %v262
    %v405 = vsel %vm403, %v398, %v266
    %v406 = vsel %vm403, %v399, %v270
    %v407 = vsel %vm403, %v400, %v274
    %v408 = vsel %vm403, %v401, %v278
    %v409 = vsel %vm403, %v402, %v282
    %vm410 = vcmask 1044480
    %v411 = vsel %vm410, %v404, %v293
    %v412 = vsel %vm410, %v405, %v297
    %v413 = vsel %vm410, %v406, %v301
    %v414 = vsel %vm410, %v407, %v305
    %v415 = vsel %vm410, %v408, %v309
    %v416 = vsel %vm410, %v409, %v313
    %vm417 = vcmask 1045504
    %v418 = vsel %vm417, %v411, %v324
    %v419 = vsel %vm417, %v412, %v328
    %v420 = vsel %vm417, %v413, %v332
    %v421 = vsel %vm417, %v414, %v336
    %v422 = vsel %vm417, %v415, %v340
    %v423 = vsel %vm417, %v416, %v344
    %vm424 = vcmask 1046528
    %v425 = vsel %vm424, %v418, %v355
    %v426 = vsel %vm424, %v419, %v359
    %v427 = vsel %vm424, %v420, %v363
    %v428 = vsel %vm424, %v421, %v367
    %v429 = vsel %vm424, %v422, %v371
    %v430 = vsel %vm424, %v423, %v375
    %v431 = vld [vmem:[%s3] ss:$2 sm:$0x3f]
    %v433 = vlaneseq
    %v434 = vshrl.u32 %v433, 7
    %v435 = vsub.s32 0, %v434
    %v436 = vrot.slane %v431, %v435
    %v437 = vlaneseq
    %v438 = vshrl.u32 %v437, 7
    %v439 = vsub.s32 1, %v438
    %v440 = vrot.slane %v431, %v439
    %v441 = vlaneseq
    %v442 = vshrl.u32 %v441, 7
    %v443 = vsub.s32 2, %v442
    %v444 = vrot.slane %v431, %v443
    %v445 = vlaneseq
    %v446 = vshrl.u32 %v445, 7
    %v447 = vsub.s32 3, %v446
    %v448 = vrot.slane %v431, %v447
    %v449 = vlaneseq
    %v450 = vshrl.u32 %v449, 7
    %v451 = vsub.s32 4, %v450
    %v452 = vrot.slane %v431, %v451
    %v453 = vlaneseq
    %v454 = vshrl.u32 %v453, 7
    %v455 = vsub.s32 5, %v454
    %v456 = vrot.slane %v431, %v455
    %v463 = vmul.f32 %v425, %v436
    %v464 = vmul.f32 %v426, %v440
    %v465 = vmul.f32 %v427, %v444
    %v466 = vmul.f32 %v428, %v448
    %v467 = vmul.f32 %v429, %v452
    %v468 = vmul.f32 %v430, %v456
    %v469 = vadd.f32 %v463, %v464
    %v470 = vadd.f32 %v469, %v465
    %v471 = vadd.f32 %v470, %v466
    %v472 = vadd.f32 %v471, %v467
    %v473 = vadd.f32 %v472, %v468
    %474 = vadd.xlane.f32.xlu0 %v473
    %v475 = vpop.xlane.xlu0 %474
    %s476 = scalar_lea.vmem %s3, 1
    %v477 = vld [vmem:[%s476] ss:$2 sm:$0x3f]
    %v479 = vlaneseq
    %v480 = vshrl.u32 %v479, 7
    %v481 = vsub.s32 0, %v480
    %v482 = vrot.slane %v477, %v481
    %v483 = vlaneseq
    %v484 = vshrl.u32 %v483, 7
    %v485 = vsub.s32 1, %v484
    %v486 = vrot.slane %v477, %v485
    %v487 = vlaneseq
    %v488 = vshrl.u32 %v487, 7
    %v489 = vsub.s32 2, %v488
    %v490 = vrot.slane %v477, %v489
    %v491 = vlaneseq
    %v492 = vshrl.u32 %v491, 7
    %v493 = vsub.s32 3, %v492
    %v494 = vrot.slane %v477, %v493
    %v495 = vlaneseq
    %v496 = vshrl.u32 %v495, 7
    %v497 = vsub.s32 4, %v496
    %v498 = vrot.slane %v477, %v497
    %v499 = vlaneseq
    %v500 = vshrl.u32 %v499, 7
    %v501 = vsub.s32 5, %v500
    %v502 = vrot.slane %v477, %v501
    %v509 = vmul.f32 %v425, %v482
    %v510 = vmul.f32 %v426, %v486
    %v511 = vmul.f32 %v427, %v490
    %v512 = vmul.f32 %v428, %v494
    %v513 = vmul.f32 %v429, %v498
    %v514 = vmul.f32 %v430, %v502
    %v515 = vadd.f32 %v509, %v510
    %v516 = vadd.f32 %v515, %v511
    %v517 = vadd.f32 %v516, %v512
    %v518 = vadd.f32 %v517, %v513
    %v519 = vadd.f32 %v518, %v514
    %520 = vadd.xlane.f32.xlu0 %v519
    %v521 = vpop.xlane.xlu0 %520
    %vm522 = vcmask 7168
    %v523 = vsel %vm522, %v475, %v521
    %v524 = vld [vmem:[%s2] sm:$0xff]
    %526 = vset.pattern.permute.xlu0 0
    %527 = vperm.xlu0 %526, %v524
    %v528 = vpop.permute.xlu0 %527
    %v530 = vmul.f32 %v523, %v528
    %v531 = vld [vmem:[%s4] sm:$0x1]
    %v533 = vlaneseq
    %v534 = vshrl.u32 %v533, 7
    %v535 = vsub.s32 0, %v534
    %v536 = vrot.slane %v531, %v535
    %v538 = vadd.f32 %v530, %v536
    %vm539 = vcmask 15360
    %540 = vst.msk [vmem:[%s5] sm:$0xff] %vm539, %v538
    // Predicated region
    $region22: #{tpu_custom_call.1} parent=1 // pred_check
      _
    $region23: #{tpu_custom_call.1} parent=1 // pred_check_branch
      %542 = sbr.rel (0) target = $region25
    $region24: #{tpu_custom_call.1} parent=1 // pred_region
      _
    $region25: #{tpu_custom_call.1} parent=1 // pred_fallthru
      _
    // Predicated region
    $region26: #{tpu_custom_call.1} parent=1 // pred_check
      _
    $region27: #{tpu_custom_call.1} parent=1 // pred_check_branch
      %544 = sbr.rel (0) target = $region29
    $region28: #{tpu_custom_call.1} parent=1 // pred_region
      _
    $region29: #{tpu_custom_call.1} parent=1 // pred_fallthru
      _
    %545 = vsyncpa [#allocation5], 1

</llo_original>
